<compile_context>
chip_gen: v5e
topology: v5e:2x2
jax: 0.10.0
libtpu: 0.0.40
codegen_flags: <defaults>
</compile_context>

<pallas_src>
import jax
import jax.numpy as jnp
from jax.experimental import pallas as pl
from jax.experimental.pallas import tpu as pltpu


def _round_up(x, m):
    return (x + m - 1) // m * m


def ffn_kernel(x_ref, w1_ref, b1_ref, w2_ref, b2_ref, o_ref):
    """grid = (row_tiles, hidden_tiles).

    Each program handles a (tm, Cp) row tile against a th-wide slice of the
    hidden dimension.  ReLU is elementwise so it commutes with the hidden
    tiling; the second matmul's partial contraction is accumulated directly in
    the resident f32 output tile (its block index is constant across k).
    """
    k = pl.program_id(1)

    # First matmul: bf16 MXU operands, f32 accumulation.
    h = jnp.dot(x_ref[...], w1_ref[...],
                preferred_element_type=jnp.float32)              # (tm, th) f32
    h = jnp.maximum(h + b1_ref[...], 0.0)                        # bias + ReLU in f32
    # Second matmul: partial contraction over this hidden slice.
    partial = jnp.dot(h.astype(jnp.bfloat16), w2_ref[...],
                      preferred_element_type=jnp.float32)        # (tm, Cp) f32

    @pl.when(k == 0)
    def _():
        o_ref[...] = partial + b2_ref[...]

    @pl.when(k != 0)
    def _():
        o_ref[...] += partial


def feedforward_pallas(x, w1, b1, w2, b2, *, tm=None, th=None):
    """y = ReLU(x @ w1 + b1) @ w2 + b2, for x of shape (..., C)."""
    orig_shape = x.shape
    orig_dtype = x.dtype
    C = orig_shape[-1]
    hidden = w1.shape[1]
    assert w1.shape == (C, hidden) and w2.shape == (hidden, C)
    assert b1.shape[-1] == hidden and b2.shape[-1] == C

    # ---- Generation-aware VMEM budget -------------------------------------
    try:
        vmem_cap = int(getattr(pltpu.get_tpu_info(), "vmem_capacity_bytes",
                               64 << 20))
    except Exception:  # pragma: no cover - conservative fallback
        vmem_cap = 64 << 20
    budget = (96 << 20) if vmem_cap >= (128 << 20) else (44 << 20)

    # ---- Channel padding to a lane-dense multiple of 128 -------------------
    Cp = _round_up(C, 128)

    x2 = x.reshape(-1, C).astype(jnp.bfloat16)   # bf16 activations for the MXU
    M = x2.shape[0]

    # Weights: keep incoming bf16 as-is; otherwise cast once here.
    w1b = w1 if w1.dtype == jnp.bfloat16 else w1.astype(jnp.bfloat16)
    w2b = w2 if w2.dtype == jnp.bfloat16 else w2.astype(jnp.bfloat16)
    if Cp != C:
        w1b = jnp.pad(w1b, ((0, Cp - C), (0, 0)))
        w2b = jnp.pad(w2b, ((0, 0), (0, Cp - C)))
    b1f = b1.reshape(1, hidden).astype(jnp.float32)
    b2f = b2.reshape(1, C).astype(jnp.float32)
    if Cp != C:
        b2f = jnp.pad(b2f, ((0, 0), (0, Cp - C)))

    # ---- Hidden tiling ------------------------------------------------------
    # Double-buffered bf16 bytes for W1 + W2 if kept fully resident.
    weight_vmem = 2 * 2 * 2 * Cp * hidden
    resident = (th is None) and (weight_vmem <= int(0.6 * budget))

    if resident:
        th = hidden
    else:
        if th is None:
            th = 512
        if hidden % 128 == 0:
            def _pick_th(t):
                t = min(t, hidden)
                # Prefer 256-aligned slices (v6e/v7x MXU is 2x256x256).
                for align in (256, 128):
                    c = t - t % align
                    while c >= align:
                        if hidden % c == 0:
                            return c
                        c -= align
                return hidden
            th = _pick_th(th)
        else:
            th = hidden

    # ---- Row tiling ---------------------------------------------------------
    if tm is None:
        # Resident weights -> moderate row tile; streamed weights -> big rows
        # so arithmetic intensity vs. re-streamed weight bytes is high.
        tm = 256 if resident else 1024
    tm = max(8, min(tm, _round_up(M, 8)))
    tm -= tm % 8
    # Give the parallel row axis >= 2 tiles so both TensorCores on a 2-TC chip
    # (v7x) get work.
    if _round_up(M, tm) // tm == 1 and tm >= 16:
        tm = _round_up((tm + 1) // 2, 8)
    Mp = _round_up(M, tm)

    # ---- Honest VMEM estimate (double-buffered tiles, no scratch) ----------
    def _tiles_vmem(tm_, th_):
        return 2 * (tm_ * Cp * 2       # x tile (bf16)
                    + Cp * th_ * 2     # W1 tile (bf16)
                    + th_ * 4          # b1 tile (f32)
                    + th_ * Cp * 2     # W2 tile (bf16)
                    + Cp * 4           # b2 tile (f32)
                    + tm_ * Cp * 4)    # out tile (f32, accumulated in place)

    while (_tiles_vmem(tm, th) > budget and th > 128
           and hidden % (th // 2) == 0 and (th // 2) % 128 == 0):
        th //= 2
    while _tiles_vmem(tm, th) > budget and tm > 8:
        tm = max(8, (tm // 2) - ((tm // 2) % 8))
        Mp = _round_up(M, tm)

    n_row = Mp // tm
    n_hid = hidden // th
    vmem_limit = int(min(_tiles_vmem(tm, th) + (4 << 20), budget))

    # ---- Padding of the flattened activations -------------------------------
    pad_m = Mp - M
    pad_c = Cp - C
    if pad_m or pad_c:
        # TODO(synk): a ragged last row tile could use a masked final store
        # instead of padding the activations in HBM.
        x2 = jnp.pad(x2, ((0, pad_m), (0, pad_c)))

    out = pl.pallas_call(
        ffn_kernel,
        out_shape=jax.ShapeDtypeStruct((Mp, Cp), jnp.float32),
        grid=(n_row, n_hid),
        in_specs=[
            pl.BlockSpec((tm, Cp), lambda i, k: (i, 0)),   # x rows (resident over k)
            pl.BlockSpec((Cp, th), lambda i, k: (0, k)),   # W1 hidden slice
            pl.BlockSpec((1, th), lambda i, k: (0, k)),    # b1 hidden slice
            pl.BlockSpec((th, Cp), lambda i, k: (k, 0)),   # W2 hidden slice
            pl.BlockSpec((1, Cp), lambda i, k: (0, 0)),    # b2
        ],
        out_specs=pl.BlockSpec((tm, Cp), lambda i, k: (i, 0)),
        compiler_params=pltpu.CompilerParams(
            dimension_semantics=("parallel", "arbitrary"),
            vmem_limit_bytes=vmem_limit),
    )(x2, w1b, b1f, w2b, b2f)

    y = out[:M, :C].astype(orig_dtype)
    return y.reshape(orig_shape)


if __name__ == "__main__":
    # Note: the original module's config mixes 'n_emb' and 'n_embd'; use the
    # same value for both.
    config = dict(n_emb=64, n_embd=64, dropout=0.0)
    B, T = 2, 8
    C = config["n_emb"]
    hidden = 4 * config["n_embd"]

    key = jax.random.PRNGKey(0)
    kx, k1, k2, k3, k4 = jax.random.split(key, 5)
    x = jax.random.normal(kx, (B, T, C), jnp.float32)
    w1 = 0.02 * jax.random.normal(k1, (C, hidden), jnp.float32)
    b1 = 0.02 * jax.random.normal(k2, (hidden,), jnp.float32)
    w2 = 0.02 * jax.random.normal(k3, (hidden, C), jnp.float32)
    b2 = 0.02 * jax.random.normal(k4, (C,), jnp.float32)

    # Pure-JAX f32 reference (eval-mode: dropout = identity).
    ref = jnp.maximum(x @ w1 + b1, 0.0) @ w2 + b2
    ref = jax.block_until_ready(ref)

    # Default path: resident weights, single hidden tile, 2 row tiles.
    y = feedforward_pallas(x, w1, b1, w2, b2)
    y = jax.block_until_ready(y)
    assert y.shape == (B, T, C)
    assert bool(jnp.all(jnp.isfinite(y)))
    assert jnp.allclose(y, ref, atol=1e-2, rtol=2e-2), \
        float(jnp.max(jnp.abs(y - ref)))

    # Streamed path: force hidden tiling (2 row tiles x 2 hidden tiles) to
    # exercise the in-place output accumulation across the reduction axis.
    y2 = feedforward_pallas(x, w1, b1, w2, b2, tm=8, th=128)
    y2 = jax.block_until_ready(y2)
    assert jnp.allclose(y2, ref, atol=1e-2, rtol=2e-2), \
        float(jnp.max(jnp.abs(y2 - ref)))

    print("KERNEL_OK")
</pallas_src>

<mosaic_0001>
module attributes {stable_mosaic.version = 11 : i64} {
  func.func @ffn_kernel(%arg0: i32, %arg1: i32, %arg2: memref<8x128xbf16, #tpu.memory_space<vmem>>, %arg3: memref<128x256xbf16, #tpu.memory_space<vmem>>, %arg4: memref<1x256xf32, #tpu.memory_space<vmem>>, %arg5: memref<256x128xbf16, #tpu.memory_space<vmem>>, %arg6: memref<1x128xf32, #tpu.memory_space<vmem>>, %arg7: memref<8x128xf32, #tpu.memory_space<vmem>>) attributes {dimension_semantics = [#tpu.dimension_semantics<parallel>, #tpu.dimension_semantics<arbitrary>], iteration_bounds = array<i64: 2, 1>, scalar_prefetch = 0 : i64, scratch_operands = 0 : i64, tpu.core_type = #tpu.core_type<tc>, window_params = [{transform_indices = @transform_0, window_bounds = array<i64: 8, 128>}, {transform_indices = @transform_1, window_bounds = array<i64: 128, 256>}, {transform_indices = @transform_2, window_bounds = array<i64: 1, 256>}, {transform_indices = @transform_3, window_bounds = array<i64: 256, 128>}, {pipeline_mode = #tpu.pipeline_mode<synchronous>, transform_indices = @transform_4, window_bounds = array<i64: 1, 128>}, {transform_indices = @transform_5, window_bounds = array<i64: 8, 128>}]} {
    %c0 = arith.constant 0 : index
    %c0_0 = arith.constant 0 : index
    %0 = vector.load %arg2[%c0, %c0_0] : memref<8x128xbf16, #tpu.memory_space<vmem>>, vector<8x128xbf16>
    %c0_1 = arith.constant 0 : index
    %c0_2 = arith.constant 0 : index
    %1 = vector.load %arg3[%c0_1, %c0_2] : memref<128x256xbf16, #tpu.memory_space<vmem>>, vector<128x256xbf16>
    %cst = arith.constant dense<0.000000e+00> : vector<8x256xf32>
    %2 = tpu.matmul %0, %1, %cst {dimension_numbers = #tpu.dot_dimension_numbers<[1], [0], [0], [1], [0, 0, 1, 1], [], []>} : vector<8x128xbf16>, vector<128x256xbf16>, vector<8x256xf32> -> vector<8x256xf32>
    %c0_3 = arith.constant 0 : index
    %c0_4 = arith.constant 0 : index
    %3 = vector.load %arg4[%c0_3, %c0_4] : memref<1x256xf32, #tpu.memory_space<vmem>>, vector<1x256xf32>
    %4 = vector.broadcast %3 : vector<1x256xf32> to vector<8x256xf32>
    %5 = arith.addf %2, %4 : vector<8x256xf32>
    %cst_5 = arith.constant 0.000000e+00 : f32
    %6 = vector.broadcast %cst_5 : f32 to vector<8x256xf32>
    %7 = arith.maximumf %5, %6 : vector<8x256xf32>
    %8 = arith.truncf %7 : vector<8x256xf32> to vector<8x256xbf16>
    %c0_6 = arith.constant 0 : index
    %c0_7 = arith.constant 0 : index
    %9 = vector.load %arg5[%c0_6, %c0_7] : memref<256x128xbf16, #tpu.memory_space<vmem>>, vector<256x128xbf16>
    %cst_8 = arith.constant dense<0.000000e+00> : vector<8x128xf32>
    %10 = tpu.matmul %8, %9, %cst_8 {dimension_numbers = #tpu.dot_dimension_numbers<[1], [0], [0], [1], [0, 0, 1, 1], [], []>} : vector<8x256xbf16>, vector<256x128xbf16>, vector<8x128xf32> -> vector<8x128xf32>
    %c0_i32 = arith.constant 0 : i32
    %11 = arith.cmpi eq, %arg1, %c0_i32 : i32
    %12 = arith.extui %11 : i1 to i32
    %c0_i32_9 = arith.constant 0 : i32
    %13 = arith.cmpi ne, %12, %c0_i32_9 : i32
    scf.if %13 {
      %c0_12 = arith.constant 0 : index
      %c0_13 = arith.constant 0 : index
      %17 = vector.load %arg6[%c0_12, %c0_13] : memref<1x128xf32, #tpu.memory_space<vmem>>, vector<1x128xf32>
      %18 = vector.broadcast %17 : vector<1x128xf32> to vector<8x128xf32>
      %19 = arith.addf %10, %18 : vector<8x128xf32>
      %c0_14 = arith.constant 0 : index
      %c0_15 = arith.constant 0 : index
      %20 = vector.load %arg7[%c0_14, %c0_15] : memref<8x128xf32, #tpu.memory_space<vmem>>, vector<8x128xf32>
      tpu.vector_store %arg7[%c0_14, %c0_15], %19 {strides = array<i32>} : memref<8x128xf32, #tpu.memory_space<vmem>>, vector<8x128xf32>,
    } else {
    }
    %c0_i32_10 = arith.constant 0 : i32
    %14 = arith.cmpi ne, %arg1, %c0_i32_10 : i32
    %15 = arith.extui %14 : i1 to i32
    %c0_i32_11 = arith.constant 0 : i32
    %16 = arith.cmpi ne, %15, %c0_i32_11 : i32
    scf.if %16 {
      %c0_12 = arith.constant 0 : index
      %c0_13 = arith.constant 0 : index
      %17 = vector.load %arg7[%c0_12, %c0_13] : memref<8x128xf32, #tpu.memory_space<vmem>>, vector<8x128xf32>
      %18 = arith.addf %17, %10 : vector<8x128xf32>
      %c0_14 = arith.constant 0 : index
      %c0_15 = arith.constant 0 : index
      %19 = vector.load %arg7[%c0_14, %c0_15] : memref<8x128xf32, #tpu.memory_space<vmem>>, vector<8x128xf32>
      tpu.vector_store %arg7[%c0_14, %c0_15], %18 {strides = array<i32>} : memref<8x128xf32, #tpu.memory_space<vmem>>, vector<8x128xf32>,
    } else {
    }
    return
  }
  func.func @transform_0(%arg0: i32, %arg1: i32) -> (i32, i32) {
    %c0_i32 = arith.constant 0 : i32
    %c0_i32_0 = arith.constant 0 : i32
    return %arg0, %c0_i32 : i32, i32
  }
  func.func @transform_1(%arg0: i32, %arg1: i32) -> (i32, i32) {
    %c0_i32 = arith.constant 0 : i32
    %c0_i32_0 = arith.constant 0 : i32
    return %c0_i32, %arg1 : i32, i32
  }
  func.func @transform_2(%arg0: i32, %arg1: i32) -> (i32, i32) {
    %c0_i32 = arith.constant 0 : i32
    %c0_i32_0 = arith.constant 0 : i32
    return %c0_i32, %arg1 : i32, i32
  }
  func.func @transform_3(%arg0: i32, %arg1: i32) -> (i32, i32) {
    %c0_i32 = arith.constant 0 : i32
    %c0_i32_0 = arith.constant 0 : i32
    return %arg1, %c0_i32 : i32, i32
  }
  func.func @transform_4(%arg0: i32, %arg1: i32) -> (i32, i32) {
    %c0_i32 = arith.constant 0 : i32
    %c0_i32_0 = arith.constant 0 : i32
    %c0_i32_1 = arith.constant 0 : i32
    return %c0_i32, %c0_i32_0 : i32, i32
  }
  func.func @transform_5(%arg0: i32, %arg1: i32) -> (i32, i32) {
    %c0_i32 = arith.constant 0 : i32
    %c0_i32_0 = arith.constant 0 : i32
    return %arg0, %c0_i32 : i32, i32
  }
}

</mosaic_0001>

<llo_original>
// kernel: tpu_custom_call.1
$region0: #{tpu_custom_call.1}
  #allocation0 [shape = 'u32[]', space=smem, size = 0x4, offset = 0x4, fixed_abs, tag = 'smem constant byte address 0x4 - core index']
  #allocation1 [shape = 'u32[72,128]{1,0:T(1,128)}', space=vmem, size = 0x9000, scoped, tag = 'internal scratch']
  %s0 = inlined_call_operand.hbm [shape: bf16[16,128], index: 0, kind: input, shape index: {}]
  %s1 = inlined_call_operand.hbm [shape: bf16[128,256], index: 1, kind: input, shape index: {}]
  %s2 = inlined_call_operand.hbm [shape: f32[1,256], index: 2, kind: input, shape index: {}]
  %s3 = inlined_call_operand.hbm [shape: bf16[256,128], index: 3, kind: input, shape index: {}]
  %s4 = inlined_call_operand.vmem [shape: f32[1,128], index: 4, kind: input, shape index: {}]
  %s5 = inlined_call_operand.hbm [shape: f32[16,128], index: 5, kind: output, shape index: {}]
  %s6 = sld [smem:[#allocation0]]
  $region77: #{tpu_custom_call.1} parent=0
    _
  %s8 = ssub.s32 1, %s6
  %s9 = scalar_select 0, %s8, %s6
  $region1: #{tpu_custom_call.1} parent=0
    #allocation2 [shape = 'u8[4096]{0}', space=vmem, size = 0x1000, scoped, tag = 'input window, operand 0']
    #allocation3 [shape = 's32[2]{0}', space=sflag, size = 0x8, scoped, tag = 'scoped memory for tpu_custom_call.1']
    #allocation4 [shape = 's32[2]{0}', space=sflag, size = 0x8, scoped, tag = 'scoped memory for tpu_custom_call.1']
    #allocation5 [shape = 'u8[65536]{0}', space=vmem, size = 0x10000, scoped, tag = 'input window, operand 1, single buffered']
    #allocation6 [shape = 's32[1]{0}', space=sflag, size = 0x4, scoped, tag = 'scoped memory for tpu_custom_call.1']
    #allocation7 [shape = 'u8[1024]{0}', space=vmem, size = 0x400, scoped, tag = 'input window, operand 2, single buffered']
    #allocation8 [shape = 'u8[65536]{0}', space=vmem, size = 0x10000, scoped, tag = 'input window, operand 3, single buffered']
    #allocation9 [shape = 's32[1]{0}', space=sflag, size = 0x4, scoped, tag = 'scoped memory for tpu_custom_call.1']
    #allocation10 [shape = 'u8[8192]{0}', space=vmem, size = 0x2000, scoped, tag = 'output window, operand 0']
    %10 = vsyncpa [#allocation3], 0
    %s11 = scalar_lea.sflag [#allocation3], 1
    %12 = vsyncpa %s11, 0
    %13 = vsyncpa [#allocation6], 0
    %14 = vsyncpa [#allocation9], 0
    %15 = vsyncpa [#allocation4], 0
    %s16 = scalar_lea.sflag [#allocation4], 1
    %17 = vsyncpa %s16, 0
    loop: start=0, step=1, limit=4
    $region2: #{tpu_custom_call.1} parent=1 // loop_pre_header
      _
    $region3: #{tpu_custom_call.1} parent=1 // loop_header
      %s19 = sphi 0, %s23
      %p20 = scmp.ge.s32.totalorder %s19, 4
      %s26 = sphi 0, %s38
      %s27 = sphi 0, %s34
      %s28 = sphi 0, %s26
      %s29 = sphi 0, %s27
      %s30 = sphi 0, %s28
      %s31 = sphi 0, %s29
      %s41 = sphi 0, %s43
      %s44 = sphi 0, %s41
      %s45 = sphi 0, %s44
      %s61 = sphi 0, %s45
      %s67 = sphi 0, %s69
      %s70 = sphi 0, %s67
      %s71 = sphi 0, %s70
      %s87 = sphi 0, %s71
      %s93 = sphi 0, %s95
      %s96 = sphi 0, %s93
      %s97 = sphi 0, %s96
      %s113 = sphi 0, %s97
      %s119 = sphi 0, %s121
      %s122 = sphi 0, %s119
      %s123 = sphi 0, %s122
      %s139 = sphi 0, %s123
      %s143 = sphi 0, %s143
      %s145 = sphi 0, %s143
      %s146 = sphi 0, %s145
      %s160 = sphi 0, %s146
      %s166 = sphi 0, %s168
      %s169 = sphi 0, %s166
      %s170 = sphi 0, %s169
      %s186 = sphi 0, %s170
    $region4: #{tpu_custom_call.1} parent=1 // loop_header_branch
      %22 = sbr.rel (%p20) target = $region8
    $region5: #{tpu_custom_call.1} parent=1 // loop_body
      %s24 = ssub.s32 %s19, 1
      %s25 = ssub.s32 %s19, 2
      %s32 = sadd.s32 1, %s27
      %p33 = scmp.ge.s32.totalorder %s32, 1
      %s34 = scalar_select %p33, 0, %s32
      %s35 = sadd.s32 1, %s26
      %s36 = scalar_select %p33, %s35, %s26
      %p37 = scmp.ge.s32.totalorder %s36, 2
      %s38 = scalar_select %p37, 0, %s36
      %s39 = ssub.s32 %s26, %s38
      %p40 = scmp.eq.s32.totalorder %s39, 0
      %s42 = sadd.s32 %s41, 1
      %s43 = scalar_select %p40, %s41, %s42
      %p46 = pneg %p40
      %p47 = scmp.eq.s32.totalorder %s19, 1
      %p48 = por %p46, %p47
      %p49 = scmp.ne.s32.totalorder %s41, %s44
      %p50 = scmp.eq.s32.totalorder %s19, 0
      %p51 = por %p49, %p50
      %p52 = scmp.ne.s32.totalorder %s41, %s44
      %p53 = scmp.eq.s32.totalorder %s24, 1
      %p54 = por %p52, %p53
      %p55 = scmp.ne.s32.totalorder %s44, %s45
      %p56 = scmp.eq.s32.totalorder %s24, 0
      %p57 = por %p55, %p56
      %p58 = scmp.ne.s32.totalorder %s44, %s45
      %p59 = scmp.eq.s32.totalorder %s25, 1
      %p60 = por %p58, %p59
      %p62 = scmp.ne.s32.totalorder %s45, %s61
      %p63 = scmp.eq.s32.totalorder %s25, 0
      %p64 = por %p62, %p63
      %s65 = ssub.s32 %s27, %s34
      %p66 = scmp.eq.s32.totalorder %s65, 0
      %s68 = sadd.s32 %s67, 1
      %s69 = scalar_select %p66, %s67, %s68
      %p72 = pneg %p66
      %p73 = scmp.eq.s32.totalorder %s19, 1
      %p74 = por %p72, %p73
      %p75 = scmp.ne.s32.totalorder %s67, %s70
      %p76 = scmp.eq.s32.totalorder %s19, 0
      %p77 = por %p75, %p76
      %p78 = scmp.ne.s32.totalorder %s67, %s70
      %p79 = scmp.eq.s32.totalorder %s24, 1
      %p80 = por %p78, %p79
      %p81 = scmp.ne.s32.totalorder %s70, %s71
      %p82 = scmp.eq.s32.totalorder %s24, 0
      %p83 = por %p81, %p82
      %p84 = scmp.ne.s32.totalorder %s70, %s71
      %p85 = scmp.eq.s32.totalorder %s25, 1
      %p86 = por %p84, %p85
      %p88 = scmp.ne.s32.totalorder %s71, %s87
      %p89 = scmp.eq.s32.totalorder %s25, 0
      %p90 = por %p88, %p89
      %s91 = ssub.s32 %s27, %s34
      %p92 = scmp.eq.s32.totalorder %s91, 0
      %s94 = sadd.s32 %s93, 1
      %s95 = scalar_select %p92, %s93, %s94
      %p98 = pneg %p92
      %p99 = scmp.eq.s32.totalorder %s19, 1
      %p100 = por %p98, %p99
      %p101 = scmp.ne.s32.totalorder %s93, %s96
      %p102 = scmp.eq.s32.totalorder %s19, 0
      %p103 = por %p101, %p102
      %p104 = scmp.ne.s32.totalorder %s93, %s96
      %p105 = scmp.eq.s32.totalorder %s24, 1
      %p106 = por %p104, %p105
      %p107 = scmp.ne.s32.totalorder %s96, %s97
      %p108 = scmp.eq.s32.totalorder %s24, 0
      %p109 = por %p107, %p108
      %p110 = scmp.ne.s32.totalorder %s96, %s97
      %p111 = scmp.eq.s32.totalorder %s25, 1
      %p112 = por %p110, %p111
      %p114 = scmp.ne.s32.totalorder %s97, %s113
      %p115 = scmp.eq.s32.totalorder %s25, 0
      %p116 = por %p114, %p115
      %s117 = ssub.s32 %s27, %s34
      %p118 = scmp.eq.s32.totalorder %s117, 0
      %s120 = sadd.s32 %s119, 1
      %s121 = scalar_select %p118, %s119, %s120
      %p124 = pneg %p118
      %p125 = scmp.eq.s32.totalorder %s19, 1
      %p126 = por %p124, %p125
      %p127 = scmp.ne.s32.totalorder %s119, %s122
      %p128 = scmp.eq.s32.totalorder %s19, 0
      %p129 = por %p127, %p128
      %p130 = scmp.ne.s32.totalorder %s119, %s122
      %p131 = scmp.eq.s32.totalorder %s24, 1
      %p132 = por %p130, %p131
      %p133 = scmp.ne.s32.totalorder %s122, %s123
      %p134 = scmp.eq.s32.totalorder %s24, 0
      %p135 = por %p133, %p134
      %p136 = scmp.ne.s32.totalorder %s122, %s123
      %p137 = scmp.eq.s32.totalorder %s25, 1
      %p138 = por %p136, %p137
      %p140 = scmp.ne.s32.totalorder %s123, %s139
      %p141 = scmp.eq.s32.totalorder %s25, 0
      %p142 = por %p140, %p141
      %s144 = sadd.s32 %s143, 1
      %p147 = scmp.eq.s32.totalorder %s19, 1
      %p148 = scmp.ne.s32.totalorder %s143, %s145
      %p149 = scmp.eq.s32.totalorder %s19, 0
      %p150 = por %p148, %p149
      %p151 = scmp.ne.s32.totalorder %s143, %s145
      %p152 = scmp.eq.s32.totalorder %s24, 1
      %p153 = por %p151, %p152
      %p154 = scmp.ne.s32.totalorder %s145, %s146
      %p155 = scmp.eq.s32.totalorder %s24, 0
      %p156 = por %p154, %p155
      %p157 = scmp.ne.s32.totalorder %s145, %s146
      %p158 = scmp.eq.s32.totalorder %s25, 1
      %p159 = por %p157, %p158
      %p161 = scmp.ne.s32.totalorder %s146, %s160
      %p162 = scmp.eq.s32.totalorder %s25, 0
      %p163 = por %p161, %p162
      %s164 = ssub.s32 %s26, %s38
      %p165 = scmp.eq.s32.totalorder %s164, 0
      %s167 = sadd.s32 %s166, 1
      %s168 = scalar_select %p165, %s166, %s167
      %p171 = pneg %p165
      %p172 = scmp.eq.s32.totalorder %s19, 1
      %p173 = por %p171, %p172
      %p174 = scmp.ne.s32.totalorder %s166, %s169
      %p175 = scmp.eq.s32.totalorder %s19, 0
      %p176 = por %p174, %p175
      %p177 = scmp.ne.s32.totalorder %s166, %s169
      %p178 = scmp.eq.s32.totalorder %s24, 1
      %p179 = por %p177, %p178
      %p180 = scmp.ne.s32.totalorder %s169, %s170
      %p181 = scmp.eq.s32.totalorder %s24, 0
      %p182 = por %p180, %p181
      %p183 = scmp.ne.s32.totalorder %s169, %s170
      %p184 = scmp.eq.s32.totalorder %s25, 1
      %p185 = por %p183, %p184
      %p187 = scmp.ne.s32.totalorder %s170, %s186
      %p188 = scmp.eq.s32.totalorder %s25, 0
      %p189 = por %p187, %p188
      %p190 = scmp.le.s32.totalorder 1, %s19
      %p191 = scmp.lt.s32.totalorder %s19, 3
      %p192 = pnand %p190, %p191
      %p193 = pneg %p192
      // Predicated region
      $region9: #{tpu_custom_call.1} parent=5 // pred_check
        _
      $region10: #{tpu_custom_call.1} parent=5 // pred_check_branch
        %195 = sbr.rel (%p192) target = $region12
      $region11: #{tpu_custom_call.1} parent=5 // pred_region
        %s196 = ssub.s32 %s19, 1
        // Predicated region
        $region13: #{tpu_custom_call.1} parent=11 // pred_check
          %p197 = pneg %p83
        $region14: #{tpu_custom_call.1} parent=11 // pred_check_branch
          %199 = sbr.rel (%p197) target = $region16
        $region15: #{tpu_custom_call.1} parent=11 // pred_region
          %s200 = smul.u32 2, %s29
          %202 = vsyncadd [#allocation6], 0
          %s203 = smul.addr %s200, 4
          %s204 = scalar_lea.hbm %s1, %s203
          %s205 = sshll.u32 %s204, 4
          %s206 = int_to_ptr.hbm [resolvable:$true] %s205
          %s207 = sshll.u32 [#allocation5], 4
          %s208 = int_to_ptr.vmem [resolvable:$true] %s207
          %213 = dma.hbm_to_vmem [thread:$0]  %s206, 2048, %s208, [#allocation6], 128, 128, 8
        $region16: #{tpu_custom_call.1} parent=11 // pred_fallthru
          _
        // Predicated region
        $region17: #{tpu_custom_call.1} parent=11 // pred_check
          %p214 = pneg %p109
        $region18: #{tpu_custom_call.1} parent=11 // pred_check_branch
          %216 = sbr.rel (%p214) target = $region20
        $region19: #{tpu_custom_call.1} parent=11 // pred_region
          %s217 = smul.u32 2, %s29
          %219 = vsyncadd [#allocation6], 0
          %s220 = scalar_lea.hbm %s2, %s217
          %s222 = sshll.u32 %s220, 4
          %s223 = int_to_ptr.hbm [resolvable:$true] %s222
          %s224 = sshll.u32 [#allocation7], 4
          %s225 = int_to_ptr.vmem [resolvable:$true] %s224
          %227 = dma.hbm_to_vmem [thread:$0]  %s223, 32, %s225, [#allocation6]
        $region20: #{tpu_custom_call.1} parent=11 // pred_fallthru
          _
        // Predicated region
        $region21: #{tpu_custom_call.1} parent=11 // pred_check
          %p228 = pneg %p135
        $region22: #{tpu_custom_call.1} parent=11 // pred_check_branch
          %230 = sbr.rel (%p228) target = $region24
        $region23: #{tpu_custom_call.1} parent=11 // pred_region
          %s231 = smul.u32 32, %s29
          %233 = vsyncadd [#allocation9], 0
          %s234 = smul.addr %s231, 4
          %s235 = scalar_lea.hbm %s3, %s234
          %s236 = sshll.u32 %s235, 4
          %s237 = int_to_ptr.hbm [resolvable:$true] %s236
          %s238 = sshll.u32 [#allocation8], 4
          %s239 = int_to_ptr.vmem [resolvable:$true] %s238
          %244 = dma.hbm_to_vmem [thread:$0]  %s237, 2048, %s239, [#allocation9], 64, 64, 4
        $region24: #{tpu_custom_call.1} parent=11 // pred_fallthru
          _
        // Predicated region
        $region25: #{tpu_custom_call.1} parent=11 // pred_check
          %p245 = pneg %p156
        $region26: #{tpu_custom_call.1} parent=11 // pred_check_branch
          %247 = sbr.rel (%p245) target = $region28
        $region27: #{tpu_custom_call.1} parent=11 // pred_region
          _
        $region28: #{tpu_custom_call.1} parent=11 // pred_fallthru
          _
      $region12: #{tpu_custom_call.1} parent=5 // pred_fallthru
        _
      %p248 = scmp.lt.s32.totalorder %s19, 2
      // Predicated region
      $region29: #{tpu_custom_call.1} parent=5 // pred_check
        %p249 = pneg %p248
      $region30: #{tpu_custom_call.1} parent=5 // pred_check_branch
        %251 = sbr.rel (%p249) target = $region32
      $region31: #{tpu_custom_call.1} parent=5 // pred_region
        // Predicated region
        $region33: #{tpu_custom_call.1} parent=31 // pred_check
          %p252 = pneg %p51
        $region34: #{tpu_custom_call.1} parent=31 // pred_check_branch
          %254 = sbr.rel (%p252) target = $region36
        $region35: #{tpu_custom_call.1} parent=31 // pred_region
          %s255 = sand.u32 %s41, 1
          %s256 = scalar_lea.sflag [#allocation3], %s255
          %s257 = sand.u32 %s41, 1
          %s258 = smul.addr %s257, 4
          %s259 = scalar_lea.vmem [#allocation2], %s258
          %261 = vsyncadd %s256, 0
          %s262 = smul.addr %s26, 4
          %s263 = scalar_lea.hbm %s0, %s262
          %s265 = sshll.u32 %s263, 4
          %s266 = int_to_ptr.hbm [resolvable:$true] %s265
          %s267 = sshll.u32 %s259, 4
          %s268 = int_to_ptr.vmem [resolvable:$true] %s267
          %270 = dma.hbm_to_vmem [thread:$0]  %s266, 64, %s268, %s256
        $region36: #{tpu_custom_call.1} parent=31 // pred_fallthru
          _
      $region32: #{tpu_custom_call.1} parent=5 // pred_fallthru
        _
      %p271 = scmp.le.s32.totalorder 1, %s19
      %p272 = scmp.lt.s32.totalorder %s19, 3
      %p273 = pnand %p271, %p272
      %p274 = pneg %p273
      // Predicated region
      $region37: #{tpu_custom_call.1} parent=5 // pred_check
        _
      $region38: #{tpu_custom_call.1} parent=5 // pred_check_branch
        %276 = sbr.rel (%p273) target = $region40
      $region39: #{tpu_custom_call.1} parent=5 // pred_region
        %s277 = ssub.s32 %s19, 1
        %s278 = sand.u32 %s44, 1
        %s279 = scalar_lea.sflag [#allocation3], %s278
        %s280 = sand.u32 %s44, 1
        %s281 = smul.addr %s280, 4
        %s282 = scalar_lea.vmem [#allocation2], %s281
        // Predicated region
        $region41: #{tpu_custom_call.1} parent=39 // pred_check
          %p283 = pneg %p57
        $region42: #{tpu_custom_call.1} parent=39 // pred_check_branch
          %285 = sbr.rel (%p283) target = $region44
        $region43: #{tpu_custom_call.1} parent=39 // pred_region
          %287 = dma.done %s279, 64
        $region44: #{tpu_custom_call.1} parent=39 // pred_fallthru
          _
        // Predicated region
        $region45: #{tpu_custom_call.1} parent=39 // pred_check
          %p288 = pneg %p83
        $region46: #{tpu_custom_call.1} parent=39 // pred_check_branch
          %290 = sbr.rel (%p288) target = $region48
        $region47: #{tpu_custom_call.1} parent=39 // pred_region
          %292 = dma.done [#allocation6], 2048
        $region48: #{tpu_custom_call.1} parent=39 // pred_fallthru
          _
        // Predicated region
        $region49: #{tpu_custom_call.1} parent=39 // pred_check
          %p293 = pneg %p109
        $region50: #{tpu_custom_call.1} parent=39 // pred_check_branch
          %295 = sbr.rel (%p293) target = $region52
        $region51: #{tpu_custom_call.1} parent=39 // pred_region
          %297 = dma.done [#allocation6], 32
        $region52: #{tpu_custom_call.1} parent=39 // pred_fallthru
          _
        // Predicated region
        $region53: #{tpu_custom_call.1} parent=39 // pred_check
          %p298 = pneg %p135
        $region54: #{tpu_custom_call.1} parent=39 // pred_check_branch
          %300 = sbr.rel (%p298) target = $region56
        $region55: #{tpu_custom_call.1} parent=39 // pred_region
          %302 = dma.done [#allocation9], 2048
        $region56: #{tpu_custom_call.1} parent=39 // pred_fallthru
          _
        %s303 = sand.u32 %s44, 1
        %s304 = scalar_lea.sflag [#allocation3], %s303
        %s305 = sand.u32 %s44, 1
        %s306 = smul.addr %s305, 4
        %s307 = scalar_lea.vmem [#allocation2], %s306
        %p308 = pneg %p57
        %p309 = pneg %p54
        %p310 = pneg %p83
        %p311 = pneg %p80
        %p312 = pneg %p109
        %p313 = pneg %p106
        %p314 = pneg %p135
        %p315 = pneg %p132
        %p316 = pneg %p156
        %p317 = pneg %p153
        %p318 = pneg %p182
        %p319 = pneg %p179
        %s320 = sand.u32 %s169, 1
        %s321 = scalar_lea.sflag [#allocation4], %s320
        %s322 = sand.u32 %s169, 1
        %s323 = smul.addr %s322, 8
        %s324 = scalar_lea.vmem [#allocation10], %s323
        %s325 = smul.u32 2, %s29
        %s326 = smul.u32 2, %s29
        %s327 = smul.u32 32, %s29
        %v328 = vld [vmem:[%s282] sm:$0xf]
        %v329 = vld [vmem:[#allocation5] sm:$0xff]
        %v330 = vld [vmem:[#allocation5 + $0x8] sm:$0xff]
        %v331 = vld [vmem:[#allocation5 + $0x10] sm:$0xff]
        %v332 = vld [vmem:[#allocation5 + $0x18] sm:$0xff]
        %v333 = vld [vmem:[#allocation5 + $0x20] sm:$0xff]
        %v334 = vld [vmem:[#allocation5 + $0x28] sm:$0xff]
        %v335 = vld [vmem:[#allocation5 + $0x30] sm:$0xff]
        %v336 = vld [vmem:[#allocation5 + $0x38] sm:$0xff]
        %v337 = vld [vmem:[#allocation5 + $0x40] sm:$0xff]
        %v338 = vld [vmem:[#allocation5 + $0x48] sm:$0xff]
        %v339 = vld [vmem:[#allocation5 + $0x50] sm:$0xff]
        %v340 = vld [vmem:[#allocation5 + $0x58] sm:$0xff]
        %v341 = vld [vmem:[#allocation5 + $0x60] sm:$0xff]
        %v342 = vld [vmem:[#allocation5 + $0x68] sm:$0xff]
        %v343 = vld [vmem:[#allocation5 + $0x70] sm:$0xff]
        %v344 = vld [vmem:[#allocation5 + $0x78] sm:$0xff]
        %v345 = vld [vmem:[#allocation7] sm:$0x3]
        %v347 = vperm.slane %v345, 0
        %v348 = vperm.slane %v345, 1
        %v367 = vunpack.c.l.b16 %v329
        %v368 = vunpack.c.h.b16 %v329
        %v369 = vunpack.c.l.b16 %v330
        %v370 = vunpack.c.h.b16 %v330
        %v371 = vunpack.c.l.b16 %v331
        %v372 = vunpack.c.h.b16 %v331
        %v373 = vunpack.c.l.b16 %v332
        %v374 = vunpack.c.h.b16 %v332
        %v375 = vunpack.c.l.b16 %v333
        %v376 = vunpack.c.h.b16 %v333
        %v377 = vunpack.c.l.b16 %v334
        %v378 = vunpack.c.h.b16 %v334
        %v379 = vunpack.c.l.b16 %v335
        %v380 = vunpack.c.h.b16 %v335
        %v381 = vunpack.c.l.b16 %v336
        %v382 = vunpack.c.h.b16 %v336
        %v383 = vunpack.c.l.b16 %v337
        %v384 = vunpack.c.h.b16 %v337
        %v385 = vunpack.c.l.b16 %v338
        %v386 = vunpack.c.h.b16 %v338
        %v387 = vunpack.c.l.b16 %v339
        %v388 = vunpack.c.h.b16 %v339
        %v389 = vunpack.c.l.b16 %v340
        %v390 = vunpack.c.h.b16 %v340
        %v391 = vunpack.c.l.b16 %v341
        %v392 = vunpack.c.h.b16 %v341
        %v393 = vunpack.c.l.b16 %v342
        %v394 = vunpack.c.h.b16 %v342
        %v395 = vunpack.c.l.b16 %v343
        %v396 = vunpack.c.h.b16 %v343
        %v397 = vunpack.c.l.b16 %v344
        %v398 = vunpack.c.h.b16 %v344
        %v399 = vpack.c.b16 %v369, %v367
        %v400 = vpack.c.b16 %v370, %v368
        %v401 = vpack.c.b16 %v373, %v371
        %v402 = vpack.c.b16 %v374, %v372
        %v403 = vpack.c.b16 %v377, %v375
        %v404 = vpack.c.b16 %v378, %v376
        %v405 = vpack.c.b16 %v381, %v379
        %v406 = vpack.c.b16 %v382, %v380
        %v407 = vpack.c.b16 %v385, %v383
        %v408 = vpack.c.b16 %v386, %v384
        %v409 = vpack.c.b16 %v389, %v387
        %v410 = vpack.c.b16 %v390, %v388
        %v411 = vpack.c.b16 %v393, %v391
        %v412 = vpack.c.b16 %v394, %v392
        %v413 = vpack.c.b16 %v397, %v395
        %v414 = vpack.c.b16 %v398, %v396
        %431 = vmatpush.bf16.msra.mxu0 %v413
        %432 = vmatpush.bf16.msra.mxu0 %v411
        %433 = vmatpush.bf16.msra.mxu0 %v409
        %434 = vmatpush.bf16.msra.mxu0 %v407
        %435 = vmatpush.bf16.msra.mxu0 %v405
        %436 = vmatpush.bf16.msra.mxu0 %v403
        %437 = vmatpush.bf16.msra.mxu0 %v401
        %438 = vmatpush.bf16.msra.mxu0 %v399
        %439 = vmatmul.bf16.gmra.mxu0 %v328
        %v440 = vpop.f32.mrf.mxu0
        %v441 = vadd.f32 %v347, %v440
        %v442 = vpop.f32.mrf.mxu0
        %443 = vdwg.mxu0
        %444 = vmatpush.bf16.msra.mxu0 %v414
        %445 = vmatpush.bf16.msra.mxu0 %v412
        %446 = vmatpush.bf16.msra.mxu0 %v410
        %447 = vmatpush.bf16.msra.mxu0 %v408
        %448 = vmatpush.bf16.msra.mxu0 %v406
        %449 = vmatpush.bf16.msra.mxu0 %v404
        %450 = vmatpush.bf16.msra.mxu0 %v402
        %451 = vmatpush.bf16.msra.mxu0 %v400
        %452 = vmatmul.bf16.gmra.mxu0 %v328
        %v453 = vpop.f32.mrf.mxu0
        %v454 = vadd.f32 %v348, %v453
        %v455 = vpop.f32.mrf.mxu0
        %456 = vdwg.mxu0
        %v457 = vmax.f32 %v441, 0.0
        %v458 = vmax.f32 %v454, 0.0
        %v459 = vpack.c.bf16 %v457, %v457
        %v460 = vpack.c.bf16 %v458, %v458
        %v461 = vld [vmem:[#allocation8] sm:$0xf]
        %v462 = vld [vmem:[#allocation8 + $0x4] sm:$0xf]
        %v463 = vld [vmem:[#allocation8 + $0x8] sm:$0xf]
        %v464 = vld [vmem:[#allocation8 + $0xc] sm:$0xf]
        %v465 = vld [vmem:[#allocation8 + $0x10] sm:$0xf]
        %v466 = vld [vmem:[#allocation8 + $0x14] sm:$0xf]
        %v467 = vld [vmem:[#allocation8 + $0x18] sm:$0xf]
        %v468 = vld [vmem:[#allocation8 + $0x1c] sm:$0xf]
        %v469 = vld [vmem:[#allocation8 + $0x20] sm:$0xf]
        %v470 = vld [vmem:[#allocation8 + $0x24] sm:$0xf]
        %v471 = vld [vmem:[#allocation8 + $0x28] sm:$0xf]
        %v472 = vld [vmem:[#allocation8 + $0x2c] sm:$0xf]
        %v473 = vld [vmem:[#allocation8 + $0x30] sm:$0xf]
        %v474 = vld [vmem:[#allocation8 + $0x34] sm:$0xf]
        %v475 = vld [vmem:[#allocation8 + $0x38] sm:$0xf]
        %v476 = vld [vmem:[#allocation8 + $0x3c] sm:$0xf]
        %v477 = vld [vmem:[#allocation8 + $0x40] sm:$0xf]
        %v478 = vld [vmem:[#allocation8 + $0x44] sm:$0xf]
        %v479 = vld [vmem:[#allocation8 + $0x48] sm:$0xf]
        %v480 = vld [vmem:[#allocation8 + $0x4c] sm:$0xf]
        %v481 = vld [vmem:[#allocation8 + $0x50] sm:$0xf]
        %v482 = vld [vmem:[#allocation8 + $0x54] sm:$0xf]
        %v483 = vld [vmem:[#allocation8 + $0x58] sm:$0xf]
        %v484 = vld [vmem:[#allocation8 + $0x5c] sm:$0xf]
        %v485 = vld [vmem:[#allocation8 + $0x60] sm:$0xf]
        %v486 = vld [vmem:[#allocation8 + $0x64] sm:$0xf]
        %v487 = vld [vmem:[#allocation8 + $0x68] sm:$0xf]
        %v488 = vld [vmem:[#allocation8 + $0x6c] sm:$0xf]
        %v489 = vld [vmem:[#allocation8 + $0x70] sm:$0xf]
        %v490 = vld [vmem:[#allocation8 + $0x74] sm:$0xf]
        %v491 = vld [vmem:[#allocation8 + $0x78] sm:$0xf]
        %v492 = vld [vmem:[#allocation8 + $0x7c] sm:$0xf]
        %v525 = vunpack.c.l.b16 %v461
        %v526 = vunpack.c.l.b16 %v462
        %v527 = vunpack.c.l.b16 %v463
        %v528 = vunpack.c.l.b16 %v464
        %v529 = vunpack.c.l.b16 %v465
        %v530 = vunpack.c.l.b16 %v466
        %v531 = vunpack.c.l.b16 %v467
        %v532 = vunpack.c.l.b16 %v468
        %v533 = vunpack.c.l.b16 %v469
        %v534 = vunpack.c.l.b16 %v470
        %v535 = vunpack.c.l.b16 %v471
        %v536 = vunpack.c.l.b16 %v472
        %v537 = vunpack.c.l.b16 %v473
        %v538 = vunpack.c.l.b16 %v474
        %v539 = vunpack.c.l.b16 %v475
        %v540 = vunpack.c.l.b16 %v476
        %v541 = vunpack.c.l.b16 %v477
        %v542 = vunpack.c.l.b16 %v478
        %v543 = vunpack.c.l.b16 %v479
        %v544 = vunpack.c.l.b16 %v480
        %v545 = vunpack.c.l.b16 %v481
        %v546 = vunpack.c.l.b16 %v482
        %v547 = vunpack.c.l.b16 %v483
        %v548 = vunpack.c.l.b16 %v484
        %v549 = vunpack.c.l.b16 %v485
        %v550 = vunpack.c.l.b16 %v486
        %v551 = vunpack.c.l.b16 %v487
        %v552 = vunpack.c.l.b16 %v488
        %v553 = vunpack.c.l.b16 %v489
        %v554 = vunpack.c.l.b16 %v490
        %v555 = vunpack.c.l.b16 %v491
        %v556 = vunpack.c.l.b16 %v492
        %v557 = vpack.c.b16 %v526, %v525
        %v558 = vpack.c.b16 %v528, %v527
        %v559 = vpack.c.b16 %v530, %v529
        %v560 = vpack.c.b16 %v532, %v531
        %v561 = vpack.c.b16 %v534, %v533
        %v562 = vpack.c.b16 %v536, %v535
        %v563 = vpack.c.b16 %v538, %v537
        %v564 = vpack.c.b16 %v540, %v539
        %v565 = vpack.c.b16 %v542, %v541
        %v566 = vpack.c.b16 %v544, %v543
        %v567 = vpack.c.b16 %v546, %v545
        %v568 = vpack.c.b16 %v548, %v547
        %v569 = vpack.c.b16 %v550, %v549
        %v570 = vpack.c.b16 %v552, %v551
        %v571 = vpack.c.b16 %v554, %v553
        %v572 = vpack.c.b16 %v556, %v555
        %589 = vmatpush.bf16.msra.mxu0 %v564
        %590 = vmatpush.bf16.msra.mxu0 %v563
        %591 = vmatpush.bf16.msra.mxu0 %v562
        %592 = vmatpush.bf16.msra.mxu0 %v561
        %593 = vmatpush.bf16.msra.mxu0 %v560
        %594 = vmatpush.bf16.msra.mxu0 %v559
        %595 = vmatpush.bf16.msra.mxu0 %v558
        %596 = vmatpush.bf16.msra.mxu0 %v557
        %597 = vmatmul.bf16.gmra.mxu0 %v459
        %v598 = vpop.f32.mrf.mxu0
        %v599 = vadd.f32 0.0, %v598
        %v600 = vpop.f32.mrf.mxu0
        %601 = vdwg.mxu0
        %602 = vmatpush.bf16.msra.mxu0 %v572
        %603 = vmatpush.bf16.msra.mxu0 %v571
        %604 = vmatpush.bf16.msra.mxu0 %v570
        %605 = vmatpush.bf16.msra.mxu0 %v569
        %606 = vmatpush.bf16.msra.mxu0 %v568
        %607 = vmatpush.bf16.msra.mxu0 %v567
        %608 = vmatpush.bf16.msra.mxu0 %v566
        %609 = vmatpush.bf16.msra.mxu0 %v565
        %610 = vmatmul.bf16.gmra.mxu0 %v460
        %v611 = vpop.f32.mrf.mxu0
        %v612 = vadd.f32 %v599, %v611
        %v613 = vpop.f32.mrf.mxu0
        %614 = vdwg.mxu0
        %p615 = scmp.eq.s32.totalorder %s29, 0
        // Predicated region
        $region57: #{tpu_custom_call.1} parent=39 // pred_check
          %p616 = pneg %p615
        $region58: #{tpu_custom_call.1} parent=39 // pred_check_branch
          %618 = sbr.rel (%p616) target = $region60
        $region59: #{tpu_custom_call.1} parent=39 // pred_region
          %v619 = vld [vmem:[%s4] sm:$0x1]
          %v621 = vperm.slane %v619, 0
          %v623 = vadd.f32 %v612, %v621
          %624 = vst [vmem:[%s324] sm:$0xff] %v623
        $region60: #{tpu_custom_call.1} parent=39 // pred_fallthru
          _
        %p625 = scmp.ne.s32.totalorder %s29, 0
        // Predicated region
        $region61: #{tpu_custom_call.1} parent=39 // pred_check
          %p626 = pneg %p625
        $region62: #{tpu_custom_call.1} parent=39 // pred_check_branch
          %628 = sbr.rel (%p626) target = $region64
        $region63: #{tpu_custom_call.1} parent=39 // pred_region
          %v629 = vld [vmem:[%s324] sm:$0xff]
          %v630 = vadd.f32 %v629, %v612
          %631 = vst [vmem:[%s324] sm:$0xff] %v630
        $region64: #{tpu_custom_call.1} parent=39 // pred_fallthru
          _
        %s632 = sand.u32 %s169, 1
        %s633 = scalar_lea.sflag [#allocation4], %s632
        %s634 = sand.u32 %s169, 1
        %s635 = smul.addr %s634, 8
        %s636 = scalar_lea.vmem [#allocation10], %s635
        // Predicated region
        $region65: #{tpu_custom_call.1} parent=39 // pred_check
          %p637 = pneg %p179
        $region66: #{tpu_custom_call.1} parent=39 // pred_check_branch
          %639 = sbr.rel (%p637) target = $region68
        $region67: #{tpu_custom_call.1} parent=39 // pred_region
          %641 = vsyncadd %s633, 0
          %s642 = smul.addr %s28, 8
          %s643 = scalar_lea.hbm %s5, %s642
          %s645 = sshll.u32 %s636, 4
          %s646 = int_to_ptr.vmem [resolvable:$true] %s645
          %s647 = sshll.u32 %s643, 4
          %s648 = int_to_ptr.hbm [resolvable:$true] %s647
          %650 = dma.vmem_to_hbm [thread:$0]  %s646, 128, %s648, %s633
        $region68: #{tpu_custom_call.1} parent=39 // pred_fallthru
          _
      $region40: #{tpu_custom_call.1} parent=5 // pred_fallthru
        _
      %p651 = scmp.le.s32.totalorder 2, %s19
      // Predicated region
      $region69: #{tpu_custom_call.1} parent=5 // pred_check
        %p652 = pneg %p651
      $region70: #{tpu_custom_call.1} parent=5 // pred_check_branch
        %654 = sbr.rel (%p652) target = $region72
      $region71: #{tpu_custom_call.1} parent=5 // pred_region
        %s655 = ssub.s32 %s19, 2
        // Predicated region
        $region73: #{tpu_custom_call.1} parent=71 // pred_check
          %p656 = pneg %p185
        $region74: #{tpu_custom_call.1} parent=71 // pred_check_branch
          %658 = sbr.rel (%p656) target = $region76
        $region75: #{tpu_custom_call.1} parent=71 // pred_region
          %s659 = sand.u32 %s170, 1
          %s660 = scalar_lea.sflag [#allocation4], %s659
          %s661 = sand.u32 %s170, 1
          %s662 = smul.addr %s661, 8
          %s663 = scalar_lea.vmem [#allocation10], %s662
          %665 = dma.done %s660, 128
        $region76: #{tpu_custom_call.1} parent=71 // pred_fallthru
          _
      $region72: #{tpu_custom_call.1} parent=5 // pred_fallthru
        _
    $region6: #{tpu_custom_call.1} parent=1 // loop_footer
      %s23 = sadd.s32 1, %s19
    $region7: #{tpu_custom_call.1} parent=1 // loop_footer_branch
      %18 = sbr.rel target = $region3
    $region8: #{tpu_custom_call.1} parent=1 // loop_exit
      _
    %666 = vsyncpa [#allocation3], 1
    %s667 = scalar_lea.sflag [#allocation3], 1
    %668 = vsyncpa %s667, 1
    %669 = vsyncpa [#allocation6], 1
    %670 = vsyncpa [#allocation9], 1
    %671 = vsyncpa [#allocation4], 1
    %s672 = scalar_lea.sflag [#allocation4], 1
    %673 = vsyncpa %s672, 1

</llo_original>
